<compile_context>
chip_gen: v7x
topology: tpu7x:2x2x1
jax: 0.10.0
libtpu: 0.0.40
codegen_flags: <defaults>
</compile_context>

<pallas_src>
import jax
import jax.numpy as jnp
from jax import lax
from jax.experimental import pallas as pl
from jax.experimental.pallas import tpu as pltpu


def _lstm_kernel(x_ref, wih_t_ref, whh_t_ref, b_ref, who_t_ref, bo_ref,
                 h0_ref, c0_ref,
                 logits_ref, hn_ref, cn_ref,
                 gx_ref, hall_ref):
    chunk = x_ref.shape[0]
    H = h0_ref.shape[1]

    # ---- Hoisted input projection: one [chunk, F] @ [F, 4H] matmul ----------
    gx_ref[...] = (
        jnp.dot(x_ref[...], wih_t_ref[...], preferred_element_type=jnp.float32)
        + b_ref[...])                            # fp32 [chunk, 4H]

    whh_t = whh_t_ref[...]                       # [H, 4H] bf16, held in vregs
    who_t = who_t_ref[...]                       # [H, O]  bf16

    # Gate-block mask, hoisted out of the loop (JAX does not CSE broadcasts).
    lane = lax.broadcasted_iota(jnp.int32, (1, 4 * H), 1)
    is_g = (lane >= 2 * H) & (lane < 3 * H)      # cell-candidate ("g") block

    def step(t, carry):
        h, c = carry                             # each [1, H] fp32
        pre = (jnp.dot(h.astype(whh_t.dtype), whh_t,
                       preferred_element_type=jnp.float32)
               + gx_ref[pl.ds(t, 1), :])         # [1, 4H] fp32
        # Full-vreg activations + one select: i/f/o -> sigmoid, g -> tanh.
        act = jnp.where(is_g, jnp.tanh(pre), jax.nn.sigmoid(pre))
        i_g = act[:, 0 * H:1 * H]
        f_g = act[:, 1 * H:2 * H]
        g_g = act[:, 2 * H:3 * H]
        o_g = act[:, 3 * H:4 * H]
        c_new = f_g * c + i_g * g_g
        h_new = o_g * jnp.tanh(c_new)
        hall_ref[pl.ds(t, 1), :] = h_new         # off the recurrence dep chain
        return (h_new, c_new)

    # chunk_size is short and static -> full unroll for cross-iteration overlap.
    h_n, c_n = lax.fori_loop(0, chunk, step, (h0_ref[...], c0_ref[...]),
                             unroll=True)
    hn_ref[...] = h_n
    cn_ref[...] = c_n

    # ---- Head projection off the critical path: one [chunk, H] @ [H, O] -----
    logits_ref[...] = (
        jnp.dot(hall_ref[...].astype(who_t.dtype), who_t,
                preferred_element_type=jnp.float32)
        + bo_ref[...])


def basic_lstm_forward(x, params, hidden):
    """x: [1, chunk_size, num_input] (batch must be 1, as in the PyTorch module)."""
    assert x.shape[0] == 1, "BasicLSTM works with only one batch input."
    x2d = x[0]                                        # [chunk, F]
    chunk, F = x2d.shape
    wih, whh, bih, bhh, who, bo = (params["w_ih"], params["w_hh"],
                                   params["b_ih"], params["b_hh"],
                                   params["w_ho"], params["b_o"])
    H = whh.shape[1]
    O = who.shape[0]
    h0 = hidden[0].reshape(1, H).astype(jnp.float32)
    c0 = hidden[1].reshape(1, H).astype(jnp.float32)

    # bf16 matmul operands (MXU-native on v6e/v7x); biases & accumulation fp32.
    mm = jnp.bfloat16
    x_in = x2d.astype(mm)                             # [chunk, F]
    wih_t = wih.T.astype(mm)                          # [F, 4H]
    whh_t = whh.T.astype(mm)                          # [H, 4H]
    who_t = who.T.astype(mm)                          # [H, O]
    b = (bih + bhh).reshape(1, 4 * H).astype(jnp.float32)
    bo2 = bo.reshape(1, O).astype(jnp.float32)

    vmem = pl.BlockSpec(memory_space=pltpu.MemorySpace.VMEM)
    logits, h_n, c_n = pl.pallas_call(
        _lstm_kernel,
        out_shape=(jax.ShapeDtypeStruct((chunk, O), jnp.float32),
                   jax.ShapeDtypeStruct((1, H), jnp.float32),
                   jax.ShapeDtypeStruct((1, H), jnp.float32)),
        in_specs=[vmem] * 8,
        out_specs=(vmem, vmem, vmem),
        scratch_shapes=[pltpu.VMEM((chunk, 4 * H), jnp.float32),   # gates_x
                        pltpu.VMEM((chunk, H), jnp.float32)],      # all h_t
    )(x_in, wih_t, whh_t, b, who_t, bo2, h0, c0)

    # Mirror PyTorch: logits [chunk*1, num_output]; hidden shaped [1, 1, H].
    return logits, (h_n.reshape(1, 1, H), c_n.reshape(1, 1, H))


def init_params(key, num_input, num_hidden, num_output):
    """Deterministic init mirroring nn.LSTM (uniform +-1/sqrt(H)) and xavier-normal h2o."""
    k1, k2, k3, k4, k5, k6 = jax.random.split(key, 6)
    bound = 1.0 / jnp.sqrt(num_hidden)
    params = {
        "w_ih": jax.random.uniform(k1, (4 * num_hidden, num_input), jnp.float32, -bound, bound),
        "w_hh": jax.random.uniform(k2, (4 * num_hidden, num_hidden), jnp.float32, -bound, bound),
        "b_ih": jax.random.uniform(k3, (4 * num_hidden,), jnp.float32, -bound, bound),
        "b_hh": jax.random.uniform(k4, (4 * num_hidden,), jnp.float32, -bound, bound),
        # xavier normal: std = sqrt(2 / (fan_in + fan_out))
        "w_ho": jax.random.normal(k5, (num_output, num_hidden), jnp.float32)
                * jnp.sqrt(2.0 / (num_hidden + num_output)),
        "b_o": jax.random.uniform(k6, (num_output,), jnp.float32, -bound, bound),
    }
    return params


def _reference_forward(x, params, hidden):
    """Pure-JAX reference (lax.scan) with matching bf16 matmul operands."""
    x2d = x[0]
    H = params["w_hh"].shape[1]
    mm = jnp.bfloat16
    wih_t = params["w_ih"].T.astype(mm)
    whh_t = params["w_hh"].T.astype(mm)
    who_t = params["w_ho"].T.astype(mm)
    b = (params["b_ih"] + params["b_hh"])[None, :].astype(jnp.float32)
    bo = params["b_o"][None, :].astype(jnp.float32)

    gx = jnp.dot(x2d.astype(mm), wih_t, preferred_element_type=jnp.float32) + b

    def step(carry, gx_t):
        h, c = carry
        pre = (jnp.dot(h.astype(mm), whh_t, preferred_element_type=jnp.float32)
               + gx_t[None, :])
        i = jax.nn.sigmoid(pre[:, 0 * H:1 * H])
        f = jax.nn.sigmoid(pre[:, 1 * H:2 * H])
        g = jnp.tanh(pre[:, 2 * H:3 * H])
        o = jax.nn.sigmoid(pre[:, 3 * H:4 * H])
        c = f * c + i * g
        h = o * jnp.tanh(c)
        return (h, c), h[0]

    init = (hidden[0].reshape(1, H).astype(jnp.float32),
            hidden[1].reshape(1, H).astype(jnp.float32))
    (h_n, c_n), hs = lax.scan(step, init, gx)
    logits = jnp.dot(hs.astype(mm), who_t, preferred_element_type=jnp.float32) + bo
    return logits, (h_n, c_n)


if __name__ == "__main__":
    num_input, num_hidden, num_output = 16, 32, 16
    chunk_size = 8

    key = jax.random.PRNGKey(0)
    k_param, k_x = jax.random.split(key)
    params = init_params(k_param, num_input, num_hidden, num_output)

    x = jax.random.normal(k_x, (1, chunk_size, num_input), jnp.float32)
    hidden = (jnp.zeros((1, 1, num_hidden), jnp.float32),
              jnp.zeros((1, 1, num_hidden), jnp.float32))

    logits, new_hidden = basic_lstm_forward(x, params, hidden)
    jax.block_until_ready(logits)

    ref_logits, (ref_h, ref_c) = _reference_forward(x, params, hidden)
    assert logits.shape == (chunk_size, num_output)
    assert jnp.allclose(logits, ref_logits, atol=2e-3, rtol=2e-3)
    assert jnp.allclose(new_hidden[0].reshape(1, num_hidden), ref_h, atol=2e-3, rtol=2e-3)
    assert jnp.allclose(new_hidden[1].reshape(1, num_hidden), ref_c, atol=2e-3, rtol=2e-3)

    print("KERNEL_OK")
</pallas_src>

<mosaic_0001>
module attributes {stable_mosaic.version = 11 : i64} {
  func.func @_lstm_kernel(%arg0: memref<8x16xbf16, #tpu.memory_space<vmem>>, %arg1: memref<16x128xbf16, #tpu.memory_space<vmem>>, %arg2: memref<32x128xbf16, #tpu.memory_space<vmem>>, %arg3: memref<1x128xf32, #tpu.memory_space<vmem>>, %arg4: memref<32x16xbf16, #tpu.memory_space<vmem>>, %arg5: memref<1x16xf32, #tpu.memory_space<vmem>>, %arg6: memref<1x32xf32, #tpu.memory_space<vmem>>, %arg7: memref<1x32xf32, #tpu.memory_space<vmem>>, %arg8: memref<8x16xf32, #tpu.memory_space<vmem>>, %arg9: memref<1x32xf32, #tpu.memory_space<vmem>>, %arg10: memref<1x32xf32, #tpu.memory_space<vmem>>, %arg11: memref<8x128xf32, #tpu.memory_space<vmem>>, %arg12: memref<8x32xf32, #tpu.memory_space<vmem>>) attributes {dimension_semantics = [], scalar_prefetch = 0 : i64, scratch_operands = 2 : i64, tpu.core_type = #tpu.core_type<tc>} {
    %c0 = arith.constant 0 : index
    %c0_0 = arith.constant 0 : index
    %0 = vector.load %arg0[%c0, %c0_0] : memref<8x16xbf16, #tpu.memory_space<vmem>>, vector<8x16xbf16>
    %c0_1 = arith.constant 0 : index
    %c0_2 = arith.constant 0 : index
    %1 = vector.load %arg1[%c0_1, %c0_2] : memref<16x128xbf16, #tpu.memory_space<vmem>>, vector<16x128xbf16>
    %cst = arith.constant dense<0.000000e+00> : vector<8x128xf32>
    %2 = tpu.matmul %0, %1, %cst {dimension_numbers = #tpu.dot_dimension_numbers<[1], [0], [0], [1], [0, 0, 1, 1], [], []>} : vector<8x16xbf16>, vector<16x128xbf16>, vector<8x128xf32> -> vector<8x128xf32>
    %c0_3 = arith.constant 0 : index
    %c0_4 = arith.constant 0 : index
    %3 = vector.load %arg3[%c0_3, %c0_4] : memref<1x128xf32, #tpu.memory_space<vmem>>, vector<1x128xf32>
    %4 = vector.broadcast %3 : vector<1x128xf32> to vector<8x128xf32>
    %5 = arith.addf %2, %4 : vector<8x128xf32>
    %c0_5 = arith.constant 0 : index
    %c0_6 = arith.constant 0 : index
    %6 = vector.load %arg11[%c0_5, %c0_6] : memref<8x128xf32, #tpu.memory_space<vmem>>, vector<8x128xf32>
    tpu.vector_store %arg11[%c0_5, %c0_6], %5 {strides = array<i32>} : memref<8x128xf32, #tpu.memory_space<vmem>>, vector<8x128xf32>,
    %c0_7 = arith.constant 0 : index
    %c0_8 = arith.constant 0 : index
    %7 = vector.load %arg2[%c0_7, %c0_8] : memref<32x128xbf16, #tpu.memory_space<vmem>>, vector<32x128xbf16>
    %c0_9 = arith.constant 0 : index
    %c0_10 = arith.constant 0 : index
    %8 = vector.load %arg4[%c0_9, %c0_10] : memref<32x16xbf16, #tpu.memory_space<vmem>>, vector<32x16xbf16>
    %9 = tpu.iota {dimensions = array<i32: 1>} : vector<1x128xi32>
    %c64_i32 = arith.constant 64 : i32
    %10 = vector.broadcast %c64_i32 : i32 to vector<1x128xi32>
    %11 = arith.cmpi sge, %9, %10 : vector<1x128xi32>
    %c96_i32 = arith.constant 96 : i32
    %12 = vector.broadcast %c96_i32 : i32 to vector<1x128xi32>
    %13 = arith.cmpi slt, %9, %12 : vector<1x128xi32>
    %14 = arith.andi %11, %13 : vector<1x128xi1>
    %c0_11 = arith.constant 0 : index
    %c0_12 = arith.constant 0 : index
    %15 = vector.load %arg6[%c0_11, %c0_12] : memref<1x32xf32, #tpu.memory_space<vmem>>, vector<1x32xf32>
    %c0_13 = arith.constant 0 : index
    %c0_14 = arith.constant 0 : index
    %16 = vector.load %arg7[%c0_13, %c0_14] : memref<1x32xf32, #tpu.memory_space<vmem>>, vector<1x32xf32>
    %c0_i32 = arith.constant 0 : i32
    %17 = arith.truncf %15 : vector<1x32xf32> to vector<1x32xbf16>
    %cst_15 = arith.constant dense<0.000000e+00> : vector<1x128xf32>
    %18 = tpu.matmul %17, %7, %cst_15 {dimension_numbers = #tpu.dot_dimension_numbers<[1], [0], [0], [1], [0, 0, 1, 1], [], []>} : vector<1x32xbf16>, vector<32x128xbf16>, vector<1x128xf32> -> vector<1x128xf32>
    %19 = arith.index_cast %c0_i32 : i32 to index
    %c0_16 = arith.constant 0 : index
    %20 = vector.load %arg11[%19, %c0_16] : memref<8x128xf32, #tpu.memory_space<vmem>>, vector<1x128xf32>
    %21 = arith.addf %18, %20 : vector<1x128xf32>
    %22 = math.tanh %21 : vector<1x128xf32>
    %23 = arith.negf %21 : vector<1x128xf32>
    %24 = math.exp %23 : vector<1x128xf32>
    %cst_17 = arith.constant 1.000000e+00 : f32
    %25 = vector.broadcast %cst_17 : f32 to vector<1x128xf32>
    %26 = arith.addf %25, %24 : vector<1x128xf32>
    %27 = arith.divf %25, %26 : vector<1x128xf32>
    %28 = arith.select %14, %22, %27 : vector<1x128xi1>, vector<1x128xf32>
    %29 = vector.extract_strided_slice %28 {offsets = [0, 0], sizes = [1, 32], strides = [1, 1]} : vector<1x128xf32> to vector<1x32xf32>
    %30 = vector.extract_strided_slice %28 {offsets = [0, 32], sizes = [1, 32], strides = [1, 1]} : vector<1x128xf32> to vector<1x32xf32>
    %31 = vector.extract_strided_slice %28 {offsets = [0, 64], sizes = [1, 32], strides = [1, 1]} : vector<1x128xf32> to vector<1x32xf32>
    %32 = vector.extract_strided_slice %28 {offsets = [0, 96], sizes = [1, 32], strides = [1, 1]} : vector<1x128xf32> to vector<1x32xf32>
    %33 = arith.mulf %30, %16 : vector<1x32xf32>
    %34 = arith.mulf %29, %31 : vector<1x32xf32>
    %35 = arith.addf %33, %34 : vector<1x32xf32>
    %36 = math.tanh %35 : vector<1x32xf32>
    %37 = arith.mulf %32, %36 : vector<1x32xf32>
    %38 = arith.index_cast %c0_i32 : i32 to index
    %c0_18 = arith.constant 0 : index
    %39 = vector.load %arg12[%38, %c0_18] : memref<8x32xf32, #tpu.memory_space<vmem>>, vector<1x32xf32>
    tpu.vector_store %arg12[%38, %c0_18], %37 {strides = array<i32>} : memref<8x32xf32, #tpu.memory_space<vmem>>, vector<1x32xf32>,
    %c1_i32 = arith.constant 1 : i32
    %40 = arith.truncf %37 : vector<1x32xf32> to vector<1x32xbf16>
    %cst_19 = arith.constant dense<0.000000e+00> : vector<1x128xf32>
    %41 = tpu.matmul %40, %7, %cst_19 {dimension_numbers = #tpu.dot_dimension_numbers<[1], [0], [0], [1], [0, 0, 1, 1], [], []>} : vector<1x32xbf16>, vector<32x128xbf16>, vector<1x128xf32> -> vector<1x128xf32>
    %42 = arith.index_cast %c1_i32 : i32 to index
    %c0_20 = arith.constant 0 : index
    %43 = vector.load %arg11[%42, %c0_20] : memref<8x128xf32, #tpu.memory_space<vmem>>, vector<1x128xf32>
    %44 = arith.addf %41, %43 : vector<1x128xf32>
    %45 = math.tanh %44 : vector<1x128xf32>
    %46 = arith.negf %44 : vector<1x128xf32>
    %47 = math.exp %46 : vector<1x128xf32>
    %cst_21 = arith.constant 1.000000e+00 : f32
    %48 = vector.broadcast %cst_21 : f32 to vector<1x128xf32>
    %49 = arith.addf %48, %47 : vector<1x128xf32>
    %50 = arith.divf %48, %49 : vector<1x128xf32>
    %51 = arith.select %14, %45, %50 : vector<1x128xi1>, vector<1x128xf32>
    %52 = vector.extract_strided_slice %51 {offsets = [0, 0], sizes = [1, 32], strides = [1, 1]} : vector<1x128xf32> to vector<1x32xf32>
    %53 = vector.extract_strided_slice %51 {offsets = [0, 32], sizes = [1, 32], strides = [1, 1]} : vector<1x128xf32> to vector<1x32xf32>
    %54 = vector.extract_strided_slice %51 {offsets = [0, 64], sizes = [1, 32], strides = [1, 1]} : vector<1x128xf32> to vector<1x32xf32>
    %55 = vector.extract_strided_slice %51 {offsets = [0, 96], sizes = [1, 32], strides = [1, 1]} : vector<1x128xf32> to vector<1x32xf32>
    %56 = arith.mulf %53, %35 : vector<1x32xf32>
    %57 = arith.mulf %52, %54 : vector<1x32xf32>
    %58 = arith.addf %56, %57 : vector<1x32xf32>
    %59 = math.tanh %58 : vector<1x32xf32>
    %60 = arith.mulf %55, %59 : vector<1x32xf32>
    %61 = arith.index_cast %c1_i32 : i32 to index
    %c0_22 = arith.constant 0 : index
    %62 = vector.load %arg12[%61, %c0_22] : memref<8x32xf32, #tpu.memory_space<vmem>>, vector<1x32xf32>
    tpu.vector_store %arg12[%61, %c0_22], %60 {strides = array<i32>} : memref<8x32xf32, #tpu.memory_space<vmem>>, vector<1x32xf32>,
    %c2_i32 = arith.constant 2 : i32
    %63 = arith.truncf %60 : vector<1x32xf32> to vector<1x32xbf16>
    %cst_23 = arith.constant dense<0.000000e+00> : vector<1x128xf32>
    %64 = tpu.matmul %63, %7, %cst_23 {dimension_numbers = #tpu.dot_dimension_numbers<[1], [0], [0], [1], [0, 0, 1, 1], [], []>} : vector<1x32xbf16>, vector<32x128xbf16>, vector<1x128xf32> -> vector<1x128xf32>
    %65 = arith.index_cast %c2_i32 : i32 to index
    %c0_24 = arith.constant 0 : index
    %66 = vector.load %arg11[%65, %c0_24] : memref<8x128xf32, #tpu.memory_space<vmem>>, vector<1x128xf32>
    %67 = arith.addf %64, %66 : vector<1x128xf32>
    %68 = math.tanh %67 : vector<1x128xf32>
    %69 = arith.negf %67 : vector<1x128xf32>
    %70 = math.exp %69 : vector<1x128xf32>
    %cst_25 = arith.constant 1.000000e+00 : f32
    %71 = vector.broadcast %cst_25 : f32 to vector<1x128xf32>
    %72 = arith.addf %71, %70 : vector<1x128xf32>
    %73 = arith.divf %71, %72 : vector<1x128xf32>
    %74 = arith.select %14, %68, %73 : vector<1x128xi1>, vector<1x128xf32>
    %75 = vector.extract_strided_slice %74 {offsets = [0, 0], sizes = [1, 32], strides = [1, 1]} : vector<1x128xf32> to vector<1x32xf32>
    %76 = vector.extract_strided_slice %74 {offsets = [0, 32], sizes = [1, 32], strides = [1, 1]} : vector<1x128xf32> to vector<1x32xf32>
    %77 = vector.extract_strided_slice %74 {offsets = [0, 64], sizes = [1, 32], strides = [1, 1]} : vector<1x128xf32> to vector<1x32xf32>
    %78 = vector.extract_strided_slice %74 {offsets = [0, 96], sizes = [1, 32], strides = [1, 1]} : vector<1x128xf32> to vector<1x32xf32>
    %79 = arith.mulf %76, %58 : vector<1x32xf32>
    %80 = arith.mulf %75, %77 : vector<1x32xf32>
    %81 = arith.addf %79, %80 : vector<1x32xf32>
    %82 = math.tanh %81 : vector<1x32xf32>
    %83 = arith.mulf %78, %82 : vector<1x32xf32>
    %84 = arith.index_cast %c2_i32 : i32 to index
    %c0_26 = arith.constant 0 : index
    %85 = vector.load %arg12[%84, %c0_26] : memref<8x32xf32, #tpu.memory_space<vmem>>, vector<1x32xf32>
    tpu.vector_store %arg12[%84, %c0_26], %83 {strides = array<i32>} : memref<8x32xf32, #tpu.memory_space<vmem>>, vector<1x32xf32>,
    %c3_i32 = arith.constant 3 : i32
    %86 = arith.truncf %83 : vector<1x32xf32> to vector<1x32xbf16>
    %cst_27 = arith.constant dense<0.000000e+00> : vector<1x128xf32>
    %87 = tpu.matmul %86, %7, %cst_27 {dimension_numbers = #tpu.dot_dimension_numbers<[1], [0], [0], [1], [0, 0, 1, 1], [], []>} : vector<1x32xbf16>, vector<32x128xbf16>, vector<1x128xf32> -> vector<1x128xf32>
    %88 = arith.index_cast %c3_i32 : i32 to index
    %c0_28 = arith.constant 0 : index
    %89 = vector.load %arg11[%88, %c0_28] : memref<8x128xf32, #tpu.memory_space<vmem>>, vector<1x128xf32>
    %90 = arith.addf %87, %89 : vector<1x128xf32>
    %91 = math.tanh %90 : vector<1x128xf32>
    %92 = arith.negf %90 : vector<1x128xf32>
    %93 = math.exp %92 : vector<1x128xf32>
    %cst_29 = arith.constant 1.000000e+00 : f32
    %94 = vector.broadcast %cst_29 : f32 to vector<1x128xf32>
    %95 = arith.addf %94, %93 : vector<1x128xf32>
    %96 = arith.divf %94, %95 : vector<1x128xf32>
    %97 = arith.select %14, %91, %96 : vector<1x128xi1>, vector<1x128xf32>
    %98 = vector.extract_strided_slice %97 {offsets = [0, 0], sizes = [1, 32], strides = [1, 1]} : vector<1x128xf32> to vector<1x32xf32>
    %99 = vector.extract_strided_slice %97 {offsets = [0, 32], sizes = [1, 32], strides = [1, 1]} : vector<1x128xf32> to vector<1x32xf32>
    %100 = vector.extract_strided_slice %97 {offsets = [0, 64], sizes = [1, 32], strides = [1, 1]} : vector<1x128xf32> to vector<1x32xf32>
    %101 = vector.extract_strided_slice %97 {offsets = [0, 96], sizes = [1, 32], strides = [1, 1]} : vector<1x128xf32> to vector<1x32xf32>
    %102 = arith.mulf %99, %81 : vector<1x32xf32>
    %103 = arith.mulf %98, %100 : vector<1x32xf32>
    %104 = arith.addf %102, %103 : vector<1x32xf32>
    %105 = math.tanh %104 : vector<1x32xf32>
    %106 = arith.mulf %101, %105 : vector<1x32xf32>
    %107 = arith.index_cast %c3_i32 : i32 to index
    %c0_30 = arith.constant 0 : index
    %108 = vector.load %arg12[%107, %c0_30] : memref<8x32xf32, #tpu.memory_space<vmem>>, vector<1x32xf32>
    tpu.vector_store %arg12[%107, %c0_30], %106 {strides = array<i32>} : memref<8x32xf32, #tpu.memory_space<vmem>>, vector<1x32xf32>,
    %c4_i32 = arith.constant 4 : i32
    %109 = arith.truncf %106 : vector<1x32xf32> to vector<1x32xbf16>
    %cst_31 = arith.constant dense<0.000000e+00> : vector<1x128xf32>
    %110 = tpu.matmul %109, %7, %cst_31 {dimension_numbers = #tpu.dot_dimension_numbers<[1], [0], [0], [1], [0, 0, 1, 1], [], []>} : vector<1x32xbf16>, vector<32x128xbf16>, vector<1x128xf32> -> vector<1x128xf32>
    %111 = arith.index_cast %c4_i32 : i32 to index
    %c0_32 = arith.constant 0 : index
    %112 = vector.load %arg11[%111, %c0_32] : memref<8x128xf32, #tpu.memory_space<vmem>>, vector<1x128xf32>
    %113 = arith.addf %110, %112 : vector<1x128xf32>
    %114 = math.tanh %113 : vector<1x128xf32>
    %115 = arith.negf %113 : vector<1x128xf32>
    %116 = math.exp %115 : vector<1x128xf32>
    %cst_33 = arith.constant 1.000000e+00 : f32
    %117 = vector.broadcast %cst_33 : f32 to vector<1x128xf32>
    %118 = arith.addf %117, %116 : vector<1x128xf32>
    %119 = arith.divf %117, %118 : vector<1x128xf32>
    %120 = arith.select %14, %114, %119 : vector<1x128xi1>, vector<1x128xf32>
    %121 = vector.extract_strided_slice %120 {offsets = [0, 0], sizes = [1, 32], strides = [1, 1]} : vector<1x128xf32> to vector<1x32xf32>
    %122 = vector.extract_strided_slice %120 {offsets = [0, 32], sizes = [1, 32], strides = [1, 1]} : vector<1x128xf32> to vector<1x32xf32>
    %123 = vector.extract_strided_slice %120 {offsets = [0, 64], sizes = [1, 32], strides = [1, 1]} : vector<1x128xf32> to vector<1x32xf32>
    %124 = vector.extract_strided_slice %120 {offsets = [0, 96], sizes = [1, 32], strides = [1, 1]} : vector<1x128xf32> to vector<1x32xf32>
    %125 = arith.mulf %122, %104 : vector<1x32xf32>
    %126 = arith.mulf %121, %123 : vector<1x32xf32>
    %127 = arith.addf %125, %126 : vector<1x32xf32>
    %128 = math.tanh %127 : vector<1x32xf32>
    %129 = arith.mulf %124, %128 : vector<1x32xf32>
    %130 = arith.index_cast %c4_i32 : i32 to index
    %c0_34 = arith.constant 0 : index
    %131 = vector.load %arg12[%130, %c0_34] : memref<8x32xf32, #tpu.memory_space<vmem>>, vector<1x32xf32>
    tpu.vector_store %arg12[%130, %c0_34], %129 {strides = array<i32>} : memref<8x32xf32, #tpu.memory_space<vmem>>, vector<1x32xf32>,
    %c5_i32 = arith.constant 5 : i32
    %132 = arith.truncf %129 : vector<1x32xf32> to vector<1x32xbf16>
    %cst_35 = arith.constant dense<0.000000e+00> : vector<1x128xf32>
    %133 = tpu.matmul %132, %7, %cst_35 {dimension_numbers = #tpu.dot_dimension_numbers<[1], [0], [0], [1], [0, 0, 1, 1], [], []>} : vector<1x32xbf16>, vector<32x128xbf16>, vector<1x128xf32> -> vector<1x128xf32>
    %134 = arith.index_cast %c5_i32 : i32 to index
    %c0_36 = arith.constant 0 : index
    %135 = vector.load %arg11[%134, %c0_36] : memref<8x128xf32, #tpu.memory_space<vmem>>, vector<1x128xf32>
    %136 = arith.addf %133, %135 : vector<1x128xf32>
    %137 = math.tanh %136 : vector<1x128xf32>
    %138 = arith.negf %136 : vector<1x128xf32>
    %139 = math.exp %138 : vector<1x128xf32>
    %cst_37 = arith.constant 1.000000e+00 : f32
    %140 = vector.broadcast %cst_37 : f32 to vector<1x128xf32>
    %141 = arith.addf %140, %139 : vector<1x128xf32>
    %142 = arith.divf %140, %141 : vector<1x128xf32>
    %143 = arith.select %14, %137, %142 : vector<1x128xi1>, vector<1x128xf32>
    %144 = vector.extract_strided_slice %143 {offsets = [0, 0], sizes = [1, 32], strides = [1, 1]} : vector<1x128xf32> to vector<1x32xf32>
    %145 = vector.extract_strided_slice %143 {offsets = [0, 32], sizes = [1, 32], strides = [1, 1]} : vector<1x128xf32> to vector<1x32xf32>
    %146 = vector.extract_strided_slice %143 {offsets = [0, 64], sizes = [1, 32], strides = [1, 1]} : vector<1x128xf32> to vector<1x32xf32>
    %147 = vector.extract_strided_slice %143 {offsets = [0, 96], sizes = [1, 32], strides = [1, 1]} : vector<1x128xf32> to vector<1x32xf32>
    %148 = arith.mulf %145, %127 : vector<1x32xf32>
    %149 = arith.mulf %144, %146 : vector<1x32xf32>
    %150 = arith.addf %148, %149 : vector<1x32xf32>
    %151 = math.tanh %150 : vector<1x32xf32>
    %152 = arith.mulf %147, %151 : vector<1x32xf32>
    %153 = arith.index_cast %c5_i32 : i32 to index
    %c0_38 = arith.constant 0 : index
    %154 = vector.load %arg12[%153, %c0_38] : memref<8x32xf32, #tpu.memory_space<vmem>>, vector<1x32xf32>
    tpu.vector_store %arg12[%153, %c0_38], %152 {strides = array<i32>} : memref<8x32xf32, #tpu.memory_space<vmem>>, vector<1x32xf32>,
    %c6_i32 = arith.constant 6 : i32
    %155 = arith.truncf %152 : vector<1x32xf32> to vector<1x32xbf16>
    %cst_39 = arith.constant dense<0.000000e+00> : vector<1x128xf32>
    %156 = tpu.matmul %155, %7, %cst_39 {dimension_numbers = #tpu.dot_dimension_numbers<[1], [0], [0], [1], [0, 0, 1, 1], [], []>} : vector<1x32xbf16>, vector<32x128xbf16>, vector<1x128xf32> -> vector<1x128xf32>
    %157 = arith.index_cast %c6_i32 : i32 to index
    %c0_40 = arith.constant 0 : index
    %158 = vector.load %arg11[%157, %c0_40] : memref<8x128xf32, #tpu.memory_space<vmem>>, vector<1x128xf32>
    %159 = arith.addf %156, %158 : vector<1x128xf32>
    %160 = math.tanh %159 : vector<1x128xf32>
    %161 = arith.negf %159 : vector<1x128xf32>
    %162 = math.exp %161 : vector<1x128xf32>
    %cst_41 = arith.constant 1.000000e+00 : f32
    %163 = vector.broadcast %cst_41 : f32 to vector<1x128xf32>
    %164 = arith.addf %163, %162 : vector<1x128xf32>
    %165 = arith.divf %163, %164 : vector<1x128xf32>
    %166 = arith.select %14, %160, %165 : vector<1x128xi1>, vector<1x128xf32>
    %167 = vector.extract_strided_slice %166 {offsets = [0, 0], sizes = [1, 32], strides = [1, 1]} : vector<1x128xf32> to vector<1x32xf32>
    %168 = vector.extract_strided_slice %166 {offsets = [0, 32], sizes = [1, 32], strides = [1, 1]} : vector<1x128xf32> to vector<1x32xf32>
    %169 = vector.extract_strided_slice %166 {offsets = [0, 64], sizes = [1, 32], strides = [1, 1]} : vector<1x128xf32> to vector<1x32xf32>
    %170 = vector.extract_strided_slice %166 {offsets = [0, 96], sizes = [1, 32], strides = [1, 1]} : vector<1x128xf32> to vector<1x32xf32>
    %171 = arith.mulf %168, %150 : vector<1x32xf32>
    %172 = arith.mulf %167, %169 : vector<1x32xf32>
    %173 = arith.addf %171, %172 : vector<1x32xf32>
    %174 = math.tanh %173 : vector<1x32xf32>
    %175 = arith.mulf %170, %174 : vector<1x32xf32>
    %176 = arith.index_cast %c6_i32 : i32 to index
    %c0_42 = arith.constant 0 : index
    %177 = vector.load %arg12[%176, %c0_42] : memref<8x32xf32, #tpu.memory_space<vmem>>, vector<1x32xf32>
    tpu.vector_store %arg12[%176, %c0_42], %175 {strides = array<i32>} : memref<8x32xf32, #tpu.memory_space<vmem>>, vector<1x32xf32>,
    %c7_i32 = arith.constant 7 : i32
    %178 = arith.truncf %175 : vector<1x32xf32> to vector<1x32xbf16>
    %cst_43 = arith.constant dense<0.000000e+00> : vector<1x128xf32>
    %179 = tpu.matmul %178, %7, %cst_43 {dimension_numbers = #tpu.dot_dimension_numbers<[1], [0], [0], [1], [0, 0, 1, 1], [], []>} : vector<1x32xbf16>, vector<32x128xbf16>, vector<1x128xf32> -> vector<1x128xf32>
    %180 = arith.index_cast %c7_i32 : i32 to index
    %c0_44 = arith.constant 0 : index
    %181 = vector.load %arg11[%180, %c0_44] : memref<8x128xf32, #tpu.memory_space<vmem>>, vector<1x128xf32>
    %182 = arith.addf %179, %181 : vector<1x128xf32>
    %183 = math.tanh %182 : vector<1x128xf32>
    %184 = arith.negf %182 : vector<1x128xf32>
    %185 = math.exp %184 : vector<1x128xf32>
    %cst_45 = arith.constant 1.000000e+00 : f32
    %186 = vector.broadcast %cst_45 : f32 to vector<1x128xf32>
    %187 = arith.addf %186, %185 : vector<1x128xf32>
    %188 = arith.divf %186, %187 : vector<1x128xf32>
    %189 = arith.select %14, %183, %188 : vector<1x128xi1>, vector<1x128xf32>
    %190 = vector.extract_strided_slice %189 {offsets = [0, 0], sizes = [1, 32], strides = [1, 1]} : vector<1x128xf32> to vector<1x32xf32>
    %191 = vector.extract_strided_slice %189 {offsets = [0, 32], sizes = [1, 32], strides = [1, 1]} : vector<1x128xf32> to vector<1x32xf32>
    %192 = vector.extract_strided_slice %189 {offsets = [0, 64], sizes = [1, 32], strides = [1, 1]} : vector<1x128xf32> to vector<1x32xf32>
    %193 = vector.extract_strided_slice %189 {offsets = [0, 96], sizes = [1, 32], strides = [1, 1]} : vector<1x128xf32> to vector<1x32xf32>
    %194 = arith.mulf %191, %173 : vector<1x32xf32>
    %195 = arith.mulf %190, %192 : vector<1x32xf32>
    %196 = arith.addf %194, %195 : vector<1x32xf32>
    %197 = math.tanh %196 : vector<1x32xf32>
    %198 = arith.mulf %193, %197 : vector<1x32xf32>
    %199 = arith.index_cast %c7_i32 : i32 to index
    %c0_46 = arith.constant 0 : index
    %200 = vector.load %arg12[%199, %c0_46] : memref<8x32xf32, #tpu.memory_space<vmem>>, vector<1x32xf32>
    tpu.vector_store %arg12[%199, %c0_46], %198 {strides = array<i32>} : memref<8x32xf32, #tpu.memory_space<vmem>>, vector<1x32xf32>,
    %c8_i32 = arith.constant 8 : i32
    %c0_47 = arith.constant 0 : index
    %c0_48 = arith.constant 0 : index
    %201 = vector.load %arg9[%c0_47, %c0_48] : memref<1x32xf32, #tpu.memory_space<vmem>>, vector<1x32xf32>
    tpu.vector_store %arg9[%c0_47, %c0_48], %198 {strides = array<i32>} : memref<1x32xf32, #tpu.memory_space<vmem>>, vector<1x32xf32>,
    %c0_49 = arith.constant 0 : index
    %c0_50 = arith.constant 0 : index
    %202 = vector.load %arg10[%c0_49, %c0_50] : memref<1x32xf32, #tpu.memory_space<vmem>>, vector<1x32xf32>
    tpu.vector_store %arg10[%c0_49, %c0_50], %196 {strides = array<i32>} : memref<1x32xf32, #tpu.memory_space<vmem>>, vector<1x32xf32>,
    %c0_51 = arith.constant 0 : index
    %c0_52 = arith.constant 0 : index
    %203 = vector.load %arg12[%c0_51, %c0_52] : memref<8x32xf32, #tpu.memory_space<vmem>>, vector<8x32xf32>
    %204 = arith.truncf %203 : vector<8x32xf32> to vector<8x32xbf16>
    %cst_53 = arith.constant dense<0.000000e+00> : vector<8x16xf32>
    %205 = tpu.matmul %204, %8, %cst_53 {dimension_numbers = #tpu.dot_dimension_numbers<[1], [0], [0], [1], [0, 0, 1, 1], [], []>} : vector<8x32xbf16>, vector<32x16xbf16>, vector<8x16xf32> -> vector<8x16xf32>
    %c0_54 = arith.constant 0 : index
    %c0_55 = arith.constant 0 : index
    %206 = vector.load %arg5[%c0_54, %c0_55] : memref<1x16xf32, #tpu.memory_space<vmem>>, vector<1x16xf32>
    %207 = vector.broadcast %206 : vector<1x16xf32> to vector<8x16xf32>
    %208 = arith.addf %205, %207 : vector<8x16xf32>
    %c0_56 = arith.constant 0 : index
    %c0_57 = arith.constant 0 : index
    %209 = vector.load %arg8[%c0_56, %c0_57] : memref<8x16xf32, #tpu.memory_space<vmem>>, vector<8x16xf32>
    tpu.vector_store %arg8[%c0_56, %c0_57], %208 {strides = array<i32>} : memref<8x16xf32, #tpu.memory_space<vmem>>, vector<8x16xf32>,
    return
  }
}

</mosaic_0001>

<llo_original>
// kernel: tpu_custom_call.1
$region0: #{tpu_custom_call.1}
  #allocation0 [shape = 'u32[]', space=smem, size = 0x4, offset = 0x4, fixed_abs, tag = 'smem constant byte address 0x4 - core index']
  #allocation1 [shape = 'u32[144,128]{1,0:T(1,128)}', space=vmem, size = 0x12000, scoped, tag = 'internal scratch']
  #allocation2 [shape = 'f32[8,128]{1,0:T(8,128)}', space=vmem, size = 0x1000, scoped, tag = 'scratch operand']
  #allocation3 [shape = 'f32[8,32]{1,0:T(8,128)}', space=vmem, size = 0x1000, scoped, tag = 'scratch operand']
  %s0 = inlined_call_operand.vmem [shape: bf16[8,16], index: 0, kind: input, shape index: {}]
  %s1 = inlined_call_operand.vmem [shape: bf16[16,128], index: 1, kind: input, shape index: {}]
  %s2 = inlined_call_operand.vmem [shape: bf16[32,128], index: 2, kind: input, shape index: {}]
  %s3 = inlined_call_operand.vmem [shape: f32[1,128], index: 3, kind: input, shape index: {}]
  %s4 = inlined_call_operand.vmem [shape: bf16[32,16], index: 4, kind: input, shape index: {}]
  %s5 = inlined_call_operand.vmem [shape: f32[1,16], index: 5, kind: input, shape index: {}]
  %s6 = inlined_call_operand.vmem [shape: f32[1,32], index: 6, kind: input, shape index: {}]
  %s7 = inlined_call_operand.vmem [shape: f32[1,32], index: 7, kind: input, shape index: {}]
  %s8 = inlined_call_operand.hbm [shape: f32[8,16], index: 8, kind: output, shape index: {0}]
  %s9 = inlined_call_operand.hbm [shape: f32[1,32], index: 9, kind: output, shape index: {1}]
  %s10 = inlined_call_operand.hbm [shape: f32[1,32], index: 10, kind: output, shape index: {2}]
  %11 = xla_tuple %s8, %s9, %s10
  %s12 = sld [smem:[#allocation0]]
  $region58: #{tpu_custom_call.1} parent=0
    _
  %s14 = ssub.s32 1, %s12
  %s15 = scalar_select 0, %s14, %s12
  $region1: #{tpu_custom_call.1} parent=0
    #allocation4 [shape = 'u8[4096]{0}', space=vmem, size = 0x1000, scoped, tag = 'output window, operand 0, single buffered']
    #allocation5 [shape = 's32[1]{0}', space=sflag, size = 0x4, scoped, tag = 'scoped memory for tpu_custom_call.1']
    #allocation6 [shape = 'u8[512]{0}', space=vmem, size = 0x400, scoped, tag = 'output window, operand 1, single buffered']
    #allocation7 [shape = 's32[1]{0}', space=sflag, size = 0x4, scoped, tag = 'scoped memory for tpu_custom_call.1']
    #allocation8 [shape = 'u8[512]{0}', space=vmem, size = 0x400, scoped, tag = 'output window, operand 2, single buffered']
    %16 = vsyncpa [#allocation5], 0
    %17 = vsyncpa [#allocation7], 0
    // Predicated region
    $region2: #{tpu_custom_call.1} parent=1 // pred_check
      _
    $region3: #{tpu_custom_call.1} parent=1 // pred_check_branch
      %19 = sbr.rel (0) target = $region5
    $region4: #{tpu_custom_call.1} parent=1 // pred_region
      _
    $region5: #{tpu_custom_call.1} parent=1 // pred_fallthru
      _
    // Predicated region
    $region6: #{tpu_custom_call.1} parent=1 // pred_check
      _
    $region7: #{tpu_custom_call.1} parent=1 // pred_check_branch
      %21 = sbr.rel (0) target = $region9
    $region8: #{tpu_custom_call.1} parent=1 // pred_region
      _
    $region9: #{tpu_custom_call.1} parent=1 // pred_fallthru
      _
    // Predicated region
    $region10: #{tpu_custom_call.1} parent=1 // pred_check
      _
    $region11: #{tpu_custom_call.1} parent=1 // pred_check_branch
      %23 = sbr.rel (0) target = $region13
    $region12: #{tpu_custom_call.1} parent=1 // pred_region
      _
    $region13: #{tpu_custom_call.1} parent=1 // pred_fallthru
      _
    // Predicated region
    $region14: #{tpu_custom_call.1} parent=1 // pred_check
      _
    $region15: #{tpu_custom_call.1} parent=1 // pred_check_branch
      %25 = sbr.rel (0) target = $region17
    $region16: #{tpu_custom_call.1} parent=1 // pred_region
      _
    $region17: #{tpu_custom_call.1} parent=1 // pred_fallthru
      _
    // Predicated region
    $region18: #{tpu_custom_call.1} parent=1 // pred_check
      _
    $region19: #{tpu_custom_call.1} parent=1 // pred_check_branch
      %27 = sbr.rel (0) target = $region21
    $region20: #{tpu_custom_call.1} parent=1 // pred_region
      _
    $region21: #{tpu_custom_call.1} parent=1 // pred_fallthru
      _
    // Predicated region
    $region22: #{tpu_custom_call.1} parent=1 // pred_check
      _
    $region23: #{tpu_custom_call.1} parent=1 // pred_check_branch
      %29 = sbr.rel (0) target = $region25
    $region24: #{tpu_custom_call.1} parent=1 // pred_region
      _
    $region25: #{tpu_custom_call.1} parent=1 // pred_fallthru
      _
    // Predicated region
    $region26: #{tpu_custom_call.1} parent=1 // pred_check
      _
    $region27: #{tpu_custom_call.1} parent=1 // pred_check_branch
      %31 = sbr.rel (0) target = $region29
    $region28: #{tpu_custom_call.1} parent=1 // pred_region
      _
    $region29: #{tpu_custom_call.1} parent=1 // pred_fallthru
      _
    // Predicated region
    $region30: #{tpu_custom_call.1} parent=1 // pred_check
      _
    $region31: #{tpu_custom_call.1} parent=1 // pred_check_branch
      %33 = sbr.rel (0) target = $region33
    $region32: #{tpu_custom_call.1} parent=1 // pred_region
      _
    $region33: #{tpu_custom_call.1} parent=1 // pred_fallthru
      _
    %v35 = vld [vmem:[%s0] sm:$0xf]
    %v36 = vld [vmem:[%s1] sm:$0xf]
    %v37 = vld [vmem:[%s1 + $0x4] sm:$0xf]
    %v38 = vld [vmem:[%s3] sm:$0x1]
    %v40 = vlaneseq
    %v41 = vshrl.u32 %v40, 7
    %v42 = vsub.s32 0, %v41
    %v43 = vrot.slane %v38, %v42
    %v47 = vunpack.c.l.b16 %v36
    %v48 = vunpack.c.l.b16 %v37
    %v49 = vpack.c.b16 %v48, %v47
    %vm51 = vcmask 130048
    %v53 = vsel %vm51, %v35, 0
    %55 = vmatprep.subr.bf16.mxu0 0
    %56 = vmatpush1.bf16.msra.mxu0 %v49
    %57 = vmatprep.subr.bf16.mxu0 0
    %58 = vmatpush1.bf16.msra.mxu0 0
    %59 = vmatprep.subr.bf16.mxu0 0
    %60 = vmatpush1.bf16.msra.mxu0 0
    %61 = vmatprep.subr.bf16.mxu0 0
    %62 = vmatpush1.bf16.msra.mxu0 0
    %63 = vmatprep.subr.bf16.mxu0 0
    %64 = vmatpush1.bf16.msra.mxu0 0
    %65 = vmatprep.subr.bf16.mxu0 0
    %66 = vmatpush1.bf16.msra.mxu0 0
    %67 = vmatprep.subr.bf16.mxu0 0
    %68 = vmatpush1.bf16.msra.mxu0 0
    %69 = vmatprep.subr.bf16.mxu0 0
    %70 = vmatpush1.bf16.msra.mxu0 0
    %71 = vmatprep.subr.bf16.mxu0 0
    %72 = vmatpush1.bf16.msra.mxu0 0
    %73 = vmatprep.subr.bf16.mxu0 0
    %74 = vmatpush1.bf16.msra.mxu0 0
    %75 = vmatprep.subr.bf16.mxu0 0
    %76 = vmatpush1.bf16.msra.mxu0 0
    %77 = vmatprep.subr.bf16.mxu0 0
    %78 = vmatpush1.bf16.msra.mxu0 0
    %79 = vmatprep.subr.bf16.mxu0 0
    %80 = vmatpush1.bf16.msra.mxu0 0
    %81 = vmatprep.subr.bf16.mxu0 0
    %82 = vmatpush1.bf16.msra.mxu0 0
    %83 = vmatprep.subr.bf16.mxu0 0
    %84 = vmatpush1.bf16.msra.mxu0 0
    %85 = vmatprep.subr.bf16.mxu0 0
    %86 = vmatpush1.bf16.msra.mxu0 0
    %87 = vmatprep.mubr.bf16.mxu0 0
    %88 = vmatmul.mubr.bf16.gmra.mrb[0].mxu0 %v53
    %v89 = vpop.f32.mrb[0].mxu0
    %v90 = vadd.f32 %v43, %v89
    %v91 = vpop.f32.mrb[0].mxu0
    %v92 = vpop.f32.mrb[0].mxu0
    %v93 = vpop.f32.mrb[0].mxu0
    %94 = vdwg.mxu0
    %95 = vst [vmem:[#allocation2] sm:$0xff] %v90
    %v96 = vld [vmem:[%s2] sm:$0xf]
    %v97 = vld [vmem:[%s2 + $0x4] sm:$0xf]
    %v98 = vld [vmem:[%s2 + $0x8] sm:$0xf]
    %v99 = vld [vmem:[%s2 + $0xc] sm:$0xf]
    %v100 = vld [vmem:[%s4] sm:$0xf]
    %v101 = vld [vmem:[%s4 + $0x4] sm:$0xf]
    %v102 = vld [vmem:[%s4 + $0x8] sm:$0xf]
    %v103 = vld [vmem:[%s4 + $0xc] sm:$0xf]
    %v104 = vlaneseq
    %v105 = vand.u32 %v104, 127
    %vm106 = vcmp.ge.s32.totalorder %v105, 64
    %vm107 = vcmp.lt.s32.totalorder %v105, 96
    %vm108 = vmand %vm106, %vm107
    %v109 = vld [vmem:[%s6] sm:$0x1]
    %v110 = vld [vmem:[%s7] sm:$0x1]
    %v111 = vpack.c.bf16 %v109, %v109
    %v112 = vld [vmem:[#allocation2] sm:$0x1]
    %v117 = vunpack.c.l.b16 %v96
    %v118 = vunpack.c.l.b16 %v97
    %v119 = vunpack.c.l.b16 %v98
    %v120 = vunpack.c.l.b16 %v99
    %v121 = vpack.c.b16 %v118, %v117
    %v122 = vpack.c.b16 %v120, %v119
    %vm125 = vcmask 261120
    %v127 = vsel %vm125, %v111, 0
    %129 = vmatprep.subr.bf16.mxu0 0
    %130 = vmatpush1.bf16.msra.mxu0 %v121
    %131 = vmatprep.subr.bf16.mxu0 0
    %132 = vmatpush1.bf16.msra.mxu0 %v122
    %133 = vmatprep.subr.bf16.mxu0 0
    %134 = vmatpush1.bf16.msra.mxu0 0
    %135 = vmatprep.subr.bf16.mxu0 0
    %136 = vmatpush1.bf16.msra.mxu0 0
    %137 = vmatprep.subr.bf16.mxu0 0
    %138 = vmatpush1.bf16.msra.mxu0 0
    %139 = vmatprep.subr.bf16.mxu0 0
    %140 = vmatpush1.bf16.msra.mxu0 0
    %141 = vmatprep.subr.bf16.mxu0 0
    %142 = vmatpush1.bf16.msra.mxu0 0
    %143 = vmatprep.subr.bf16.mxu0 0
    %144 = vmatpush1.bf16.msra.mxu0 0
    %145 = vmatprep.subr.bf16.mxu0 0
    %146 = vmatpush1.bf16.msra.mxu0 0
    %147 = vmatprep.subr.bf16.mxu0 0
    %148 = vmatpush1.bf16.msra.mxu0 0
    %149 = vmatprep.subr.bf16.mxu0 0
    %150 = vmatpush1.bf16.msra.mxu0 0
    %151 = vmatprep.subr.bf16.mxu0 0
    %152 = vmatpush1.bf16.msra.mxu0 0
    %153 = vmatprep.subr.bf16.mxu0 0
    %154 = vmatpush1.bf16.msra.mxu0 0
    %155 = vmatprep.subr.bf16.mxu0 0
    %156 = vmatpush1.bf16.msra.mxu0 0
    %157 = vmatprep.subr.bf16.mxu0 0
    %158 = vmatpush1.bf16.msra.mxu0 0
    %159 = vmatprep.subr.bf16.mxu0 0
    %160 = vmatpush1.bf16.msra.mxu0 0
    %161 = vmatprep.mubr.bf16.mxu0 0
    %162 = vmatmul.mubr.bf16.gmra.mrb[0].mxu0 %v127
    %v163 = vpop.f32.mrb[0].mxu0
    %v164 = vadd.f32 %v112, %v163
    %v165 = vpop.f32.mrb[0].mxu0
    %v166 = vpop.f32.mrb[0].mxu0
    %v167 = vpop.f32.mrb[0].mxu0
    %168 = vdwg.mxu0
    %v169 = vtanh.pop %v164
    %v170 = vxor.u32 %v164, 2147483648
    %v171 = vmul.f32 %v170, 1.442695
    %v172 = vpow.pop %v171
    %v173 = vadd.f32 %v172, 1.0
    %v174 = vrcp.pop %v173
    %v175 = vmul.f32 1.0, %v174
    %v176 = vsel %vm108, %v169, %v175
    %v178 = vlaneseq
    %v179 = vshrl.u32 %v178, 7
    %v180 = vsub.s32 0, %v179
    %v181 = vrot.slane %v110, %v180
    %182 = vrot.lane.b32.xlu0 %v181, 32
    %v183 = vpop.permute.xlu0 %182
    %v185 = vmul.f32 %v176, %v183
    %187 = vrot.lane.b32.xlu0 %v176, 64
    %v188 = vpop.permute.xlu0 %187
    %v190 = vmul.f32 %v176, %v188
    %192 = vrot.lane.b32.xlu0 %v190, 32
    %v193 = vpop.permute.xlu0 %192
    %v195 = vadd.f32 %v185, %v193
    %v196 = vtanh.pop %v195
    %198 = vrot.lane.b32.xlu0 %v196, 64
    %v199 = vpop.permute.xlu0 %198
    %v201 = vmul.f32 %v176, %v199
    %203 = vrot.lane.b32.xlu0 %v201, 32
    %v204 = vpop.permute.xlu0 %203
    %vm206 = vcmask 253952
    %207 = vst.msk [vmem:[#allocation3] sm:$0x1] %vm206, %v204
    %v208 = vpack.c.bf16 %v201, %v201
    %v209 = vld [vmem:[#allocation2 + $0x1] sm:$0x1]
    %211 = vrot.lane.b32.xlu0 %v208, 32
    %v212 = vpop.permute.xlu0 %211
    %v214 = vsel %vm125, %v212, 0
    %216 = vmatprep.subr.bf16.mxu0 0
    %217 = vmatpush1.bf16.msra.mxu0 %v121
    %218 = vmatprep.subr.bf16.mxu0 0
    %219 = vmatpush1.bf16.msra.mxu0 %v122
    %220 = vmatprep.subr.bf16.mxu0 0
    %221 = vmatpush1.bf16.msra.mxu0 0
    %222 = vmatprep.subr.bf16.mxu0 0
    %223 = vmatpush1.bf16.msra.mxu0 0
    %224 = vmatprep.subr.bf16.mxu0 0
    %225 = vmatpush1.bf16.msra.mxu0 0
    %226 = vmatprep.subr.bf16.mxu0 0
    %227 = vmatpush1.bf16.msra.mxu0 0
    %228 = vmatprep.subr.bf16.mxu0 0
    %229 = vmatpush1.bf16.msra.mxu0 0
    %230 = vmatprep.subr.bf16.mxu0 0
    %231 = vmatpush1.bf16.msra.mxu0 0
    %232 = vmatprep.subr.bf16.mxu0 0
    %233 = vmatpush1.bf16.msra.mxu0 0
    %234 = vmatprep.subr.bf16.mxu0 0
    %235 = vmatpush1.bf16.msra.mxu0 0
    %236 = vmatprep.subr.bf16.mxu0 0
    %237 = vmatpush1.bf16.msra.mxu0 0
    %238 = vmatprep.subr.bf16.mxu0 0
    %239 = vmatpush1.bf16.msra.mxu0 0
    %240 = vmatprep.subr.bf16.mxu0 0
    %241 = vmatpush1.bf16.msra.mxu0 0
    %242 = vmatprep.subr.bf16.mxu0 0
    %243 = vmatpush1.bf16.msra.mxu0 0
    %244 = vmatprep.subr.bf16.mxu0 0
    %245 = vmatpush1.bf16.msra.mxu0 0
    %246 = vmatprep.subr.bf16.mxu0 0
    %247 = vmatpush1.bf16.msra.mxu0 0
    %248 = vmatprep.mubr.bf16.mxu0 0
    %249 = vmatmul.mubr.bf16.gmra.mrb[0].mxu0 %v214
    %v250 = vpop.f32.mrb[0].mxu0
    %v251 = vadd.f32 %v209, %v250
    %v252 = vpop.f32.mrb[0].mxu0
    %v253 = vpop.f32.mrb[0].mxu0
    %v254 = vpop.f32.mrb[0].mxu0
    %255 = vdwg.mxu0
    %v256 = vtanh.pop %v251
    %v257 = vxor.u32 %v251, 2147483648
    %v258 = vmul.f32 %v257, 1.442695
    %v259 = vpow.pop %v258
    %v260 = vadd.f32 %v259, 1.0
    %v261 = vrcp.pop %v260
    %v262 = vmul.f32 1.0, %v261
    %v263 = vsel %vm108, %v256, %v262
    %v264 = vmul.f32 %v263, %v195
    %266 = vrot.lane.b32.xlu0 %v263, 64
    %v267 = vpop.permute.xlu0 %266
    %v269 = vmul.f32 %v263, %v267
    %271 = vrot.lane.b32.xlu0 %v269, 32
    %v272 = vpop.permute.xlu0 %271
    %v274 = vadd.f32 %v264, %v272
    %v275 = vtanh.pop %v274
    %277 = vrot.lane.b32.xlu0 %v275, 64
    %v278 = vpop.permute.xlu0 %277
    %v280 = vmul.f32 %v263, %v278
    %282 = vrot.lane.b32.xlu0 %v280, 32
    %v283 = vpop.permute.xlu0 %282
    %285 = vst.msk [vmem:[#allocation3 + $0x1] sm:$0x1] %vm206, %v283
    %v286 = vpack.c.bf16 %v280, %v280
    %v287 = vld [vmem:[#allocation2 + $0x2] sm:$0x1]
    %289 = vrot.lane.b32.xlu0 %v286, 32
    %v290 = vpop.permute.xlu0 %289
    %v292 = vsel %vm125, %v290, 0
    %294 = vmatprep.subr.bf16.mxu0 0
    %295 = vmatpush1.bf16.msra.mxu0 %v121
    %296 = vmatprep.subr.bf16.mxu0 0
    %297 = vmatpush1.bf16.msra.mxu0 %v122
    %298 = vmatprep.subr.bf16.mxu0 0
    %299 = vmatpush1.bf16.msra.mxu0 0
    %300 = vmatprep.subr.bf16.mxu0 0
    %301 = vmatpush1.bf16.msra.mxu0 0
    %302 = vmatprep.subr.bf16.mxu0 0
    %303 = vmatpush1.bf16.msra.mxu0 0
    %304 = vmatprep.subr.bf16.mxu0 0
    %305 = vmatpush1.bf16.msra.mxu0 0
    %306 = vmatprep.subr.bf16.mxu0 0
    %307 = vmatpush1.bf16.msra.mxu0 0
    %308 = vmatprep.subr.bf16.mxu0 0
    %309 = vmatpush1.bf16.msra.mxu0 0
    %310 = vmatprep.subr.bf16.mxu0 0
    %311 = vmatpush1.bf16.msra.mxu0 0
    %312 = vmatprep.subr.bf16.mxu0 0
    %313 = vmatpush1.bf16.msra.mxu0 0
    %314 = vmatprep.subr.bf16.mxu0 0
    %315 = vmatpush1.bf16.msra.mxu0 0
    %316 = vmatprep.subr.bf16.mxu0 0
    %317 = vmatpush1.bf16.msra.mxu0 0
    %318 = vmatprep.subr.bf16.mxu0 0
    %319 = vmatpush1.bf16.msra.mxu0 0
    %320 = vmatprep.subr.bf16.mxu0 0
    %321 = vmatpush1.bf16.msra.mxu0 0
    %322 = vmatprep.subr.bf16.mxu0 0
    %323 = vmatpush1.bf16.msra.mxu0 0
    %324 = vmatprep.subr.bf16.mxu0 0
    %325 = vmatpush1.bf16.msra.mxu0 0
    %326 = vmatprep.mubr.bf16.mxu0 0
    %327 = vmatmul.mubr.bf16.gmra.mrb[0].mxu0 %v292
    %v328 = vpop.f32.mrb[0].mxu0
    %v329 = vadd.f32 %v287, %v328
    %v330 = vpop.f32.mrb[0].mxu0
    %v331 = vpop.f32.mrb[0].mxu0
    %v332 = vpop.f32.mrb[0].mxu0
    %333 = vdwg.mxu0
    %v334 = vtanh.pop %v329
    %v335 = vxor.u32 %v329, 2147483648
    %v336 = vmul.f32 %v335, 1.442695
    %v337 = vpow.pop %v336
    %v338 = vadd.f32 %v337, 1.0
    %v339 = vrcp.pop %v338
    %v340 = vmul.f32 1.0, %v339
    %v341 = vsel %vm108, %v334, %v340
    %v342 = vmul.f32 %v341, %v274
    %344 = vrot.lane.b32.xlu0 %v341, 64
    %v345 = vpop.permute.xlu0 %344
    %v347 = vmul.f32 %v341, %v345
    %349 = vrot.lane.b32.xlu0 %v347, 32
    %v350 = vpop.permute.xlu0 %349
    %v352 = vadd.f32 %v342, %v350
    %v353 = vtanh.pop %v352
    %355 = vrot.lane.b32.xlu0 %v353, 64
    %v356 = vpop.permute.xlu0 %355
    %v358 = vmul.f32 %v341, %v356
    %360 = vrot.lane.b32.xlu0 %v358, 32
    %v361 = vpop.permute.xlu0 %360
    %363 = vst.msk [vmem:[#allocation3 + $0x2] sm:$0x1] %vm206, %v361
    %v364 = vpack.c.bf16 %v358, %v358
    %v365 = vld [vmem:[#allocation2 + $0x3] sm:$0x1]
    %367 = vrot.lane.b32.xlu0 %v364, 32
    %v368 = vpop.permute.xlu0 %367
    %v370 = vsel %vm125, %v368, 0
    %372 = vmatprep.subr.bf16.mxu0 0
    %373 = vmatpush1.bf16.msra.mxu0 %v121
    %374 = vmatprep.subr.bf16.mxu0 0
    %375 = vmatpush1.bf16.msra.mxu0 %v122
    %376 = vmatprep.subr.bf16.mxu0 0
    %377 = vmatpush1.bf16.msra.mxu0 0
    %378 = vmatprep.subr.bf16.mxu0 0
    %379 = vmatpush1.bf16.msra.mxu0 0
    %380 = vmatprep.subr.bf16.mxu0 0
    %381 = vmatpush1.bf16.msra.mxu0 0
    %382 = vmatprep.subr.bf16.mxu0 0
    %383 = vmatpush1.bf16.msra.mxu0 0
    %384 = vmatprep.subr.bf16.mxu0 0
    %385 = vmatpush1.bf16.msra.mxu0 0
    %386 = vmatprep.subr.bf16.mxu0 0
    %387 = vmatpush1.bf16.msra.mxu0 0
    %388 = vmatprep.subr.bf16.mxu0 0
    %389 = vmatpush1.bf16.msra.mxu0 0
    %390 = vmatprep.subr.bf16.mxu0 0
    %391 = vmatpush1.bf16.msra.mxu0 0
    %392 = vmatprep.subr.bf16.mxu0 0
    %393 = vmatpush1.bf16.msra.mxu0 0
    %394 = vmatprep.subr.bf16.mxu0 0
    %395 = vmatpush1.bf16.msra.mxu0 0
    %396 = vmatprep.subr.bf16.mxu0 0
    %397 = vmatpush1.bf16.msra.mxu0 0
    %398 = vmatprep.subr.bf16.mxu0 0
    %399 = vmatpush1.bf16.msra.mxu0 0
    %400 = vmatprep.subr.bf16.mxu0 0
    %401 = vmatpush1.bf16.msra.mxu0 0
    %402 = vmatprep.subr.bf16.mxu0 0
    %403 = vmatpush1.bf16.msra.mxu0 0
    %404 = vmatprep.mubr.bf16.mxu0 0
    %405 = vmatmul.mubr.bf16.gmra.mrb[0].mxu0 %v370
    %v406 = vpop.f32.mrb[0].mxu0
    %v407 = vadd.f32 %v365, %v406
    %v408 = vpop.f32.mrb[0].mxu0
    %v409 = vpop.f32.mrb[0].mxu0
    %v410 = vpop.f32.mrb[0].mxu0
    %411 = vdwg.mxu0
    %v412 = vtanh.pop %v407
    %v413 = vxor.u32 %v407, 2147483648
    %v414 = vmul.f32 %v413, 1.442695
    %v415 = vpow.pop %v414
    %v416 = vadd.f32 %v415, 1.0
    %v417 = vrcp.pop %v416
    %v418 = vmul.f32 1.0, %v417
    %v419 = vsel %vm108, %v412, %v418
    %v420 = vmul.f32 %v419, %v352
    %422 = vrot.lane.b32.xlu0 %v419, 64
    %v423 = vpop.permute.xlu0 %422
    %v425 = vmul.f32 %v419, %v423
    %427 = vrot.lane.b32.xlu0 %v425, 32
    %v428 = vpop.permute.xlu0 %427
    %v430 = vadd.f32 %v420, %v428
    %v431 = vtanh.pop %v430
    %433 = vrot.lane.b32.xlu0 %v431, 64
    %v434 = vpop.permute.xlu0 %433
    %v436 = vmul.f32 %v419, %v434
    %438 = vrot.lane.b32.xlu0 %v436, 32
    %v439 = vpop.permute.xlu0 %438
    %441 = vst.msk [vmem:[#allocation3 + $0x3] sm:$0x1] %vm206, %v439
    %v442 = vpack.c.bf16 %v436, %v436
    %v443 = vld [vmem:[#allocation2 + $0x4] sm:$0x1]
    %445 = vrot.lane.b32.xlu0 %v442, 32
    %v446 = vpop.permute.xlu0 %445
    %v448 = vsel %vm125, %v446, 0
    %450 = vmatprep.subr.bf16.mxu0 0
    %451 = vmatpush1.bf16.msra.mxu0 %v121
    %452 = vmatprep.subr.bf16.mxu0 0
    %453 = vmatpush1.bf16.msra.mxu0 %v122
    %454 = vmatprep.subr.bf16.mxu0 0
    %455 = vmatpush1.bf16.msra.mxu0 0
    %456 = vmatprep.subr.bf16.mxu0 0
    %457 = vmatpush1.bf16.msra.mxu0 0
    %458 = vmatprep.subr.bf16.mxu0 0
    %459 = vmatpush1.bf16.msra.mxu0 0
    %460 = vmatprep.subr.bf16.mxu0 0
    %461 = vmatpush1.bf16.msra.mxu0 0
    %462 = vmatprep.subr.bf16.mxu0 0
    %463 = vmatpush1.bf16.msra.mxu0 0
    %464 = vmatprep.subr.bf16.mxu0 0
    %465 = vmatpush1.bf16.msra.mxu0 0
    %466 = vmatprep.subr.bf16.mxu0 0
    %467 = vmatpush1.bf16.msra.mxu0 0
    %468 = vmatprep.subr.bf16.mxu0 0
    %469 = vmatpush1.bf16.msra.mxu0 0
    %470 = vmatprep.subr.bf16.mxu0 0
    %471 = vmatpush1.bf16.msra.mxu0 0
    %472 = vmatprep.subr.bf16.mxu0 0
    %473 = vmatpush1.bf16.msra.mxu0 0
    %474 = vmatprep.subr.bf16.mxu0 0
    %475 = vmatpush1.bf16.msra.mxu0 0
    %476 = vmatprep.subr.bf16.mxu0 0
    %477 = vmatpush1.bf16.msra.mxu0 0
    %478 = vmatprep.subr.bf16.mxu0 0
    %479 = vmatpush1.bf16.msra.mxu0 0
    %480 = vmatprep.subr.bf16.mxu0 0
    %481 = vmatpush1.bf16.msra.mxu0 0
    %482 = vmatprep.mubr.bf16.mxu0 0
    %483 = vmatmul.mubr.bf16.gmra.mrb[0].mxu0 %v448
    %v484 = vpop.f32.mrb[0].mxu0
    %v485 = vadd.f32 %v443, %v484
    %v486 = vpop.f32.mrb[0].mxu0
    %v487 = vpop.f32.mrb[0].mxu0
    %v488 = vpop.f32.mrb[0].mxu0
    %489 = vdwg.mxu0
    %v490 = vtanh.pop %v485
    %v491 = vxor.u32 %v485, 2147483648
    %v492 = vmul.f32 %v491, 1.442695
    %v493 = vpow.pop %v492
    %v494 = vadd.f32 %v493, 1.0
    %v495 = vrcp.pop %v494
    %v496 = vmul.f32 1.0, %v495
    %v497 = vsel %vm108, %v490, %v496
    %v498 = vmul.f32 %v497, %v430
    %500 = vrot.lane.b32.xlu0 %v497, 64
    %v501 = vpop.permute.xlu0 %500
    %v503 = vmul.f32 %v497, %v501
    %505 = vrot.lane.b32.xlu0 %v503, 32
    %v506 = vpop.permute.xlu0 %505
    %v508 = vadd.f32 %v498, %v506
    %v509 = vtanh.pop %v508
    %511 = vrot.lane.b32.xlu0 %v509, 64
    %v512 = vpop.permute.xlu0 %511
    %v514 = vmul.f32 %v497, %v512
    %516 = vrot.lane.b32.xlu0 %v514, 32
    %v517 = vpop.permute.xlu0 %516
    %519 = vst.msk [vmem:[#allocation3 + $0x4] sm:$0x1] %vm206, %v517
    %v520 = vpack.c.bf16 %v514, %v514
    %v521 = vld [vmem:[#allocation2 + $0x5] sm:$0x1]
    %523 = vrot.lane.b32.xlu0 %v520, 32
    %v524 = vpop.permute.xlu0 %523
    %v526 = vsel %vm125, %v524, 0
    %528 = vmatprep.subr.bf16.mxu0 0
    %529 = vmatpush1.bf16.msra.mxu0 %v121
    %530 = vmatprep.subr.bf16.mxu0 0
    %531 = vmatpush1.bf16.msra.mxu0 %v122
    %532 = vmatprep.subr.bf16.mxu0 0
    %533 = vmatpush1.bf16.msra.mxu0 0
    %534 = vmatprep.subr.bf16.mxu0 0
    %535 = vmatpush1.bf16.msra.mxu0 0
    %536 = vmatprep.subr.bf16.mxu0 0
    %537 = vmatpush1.bf16.msra.mxu0 0
    %538 = vmatprep.subr.bf16.mxu0 0
    %539 = vmatpush1.bf16.msra.mxu0 0
    %540 = vmatprep.subr.bf16.mxu0 0
    %541 = vmatpush1.bf16.msra.mxu0 0
    %542 = vmatprep.subr.bf16.mxu0 0
    %543 = vmatpush1.bf16.msra.mxu0 0
    %544 = vmatprep.subr.bf16.mxu0 0
    %545 = vmatpush1.bf16.msra.mxu0 0
    %546 = vmatprep.subr.bf16.mxu0 0
    %547 = vmatpush1.bf16.msra.mxu0 0
    %548 = vmatprep.subr.bf16.mxu0 0
    %549 = vmatpush1.bf16.msra.mxu0 0
    %550 = vmatprep.subr.bf16.mxu0 0
    %551 = vmatpush1.bf16.msra.mxu0 0
    %552 = vmatprep.subr.bf16.mxu0 0
    %553 = vmatpush1.bf16.msra.mxu0 0
    %554 = vmatprep.subr.bf16.mxu0 0
    %555 = vmatpush1.bf16.msra.mxu0 0
    %556 = vmatprep.subr.bf16.mxu0 0
    %557 = vmatpush1.bf16.msra.mxu0 0
    %558 = vmatprep.subr.bf16.mxu0 0
    %559 = vmatpush1.bf16.msra.mxu0 0
    %560 = vmatprep.mubr.bf16.mxu0 0
    %561 = vmatmul.mubr.bf16.gmra.mrb[0].mxu0 %v526
    %v562 = vpop.f32.mrb[0].mxu0
    %v563 = vadd.f32 %v521, %v562
    %v564 = vpop.f32.mrb[0].mxu0
    %v565 = vpop.f32.mrb[0].mxu0
    %v566 = vpop.f32.mrb[0].mxu0
    %567 = vdwg.mxu0
    %v568 = vtanh.pop %v563
    %v569 = vxor.u32 %v563, 2147483648
    %v570 = vmul.f32 %v569, 1.442695
    %v571 = vpow.pop %v570
    %v572 = vadd.f32 %v571, 1.0
    %v573 = vrcp.pop %v572
    %v574 = vmul.f32 1.0, %v573
    %v575 = vsel %vm108, %v568, %v574
    %v576 = vmul.f32 %v575, %v508
    %578 = vrot.lane.b32.xlu0 %v575, 64
    %v579 = vpop.permute.xlu0 %578
    %v581 = vmul.f32 %v575, %v579
    %583 = vrot.lane.b32.xlu0 %v581, 32
    %v584 = vpop.permute.xlu0 %583
    %v586 = vadd.f32 %v576, %v584
    %v587 = vtanh.pop %v586
    %589 = vrot.lane.b32.xlu0 %v587, 64
    %v590 = vpop.permute.xlu0 %589
    %v592 = vmul.f32 %v575, %v590
    %594 = vrot.lane.b32.xlu0 %v592, 32
    %v595 = vpop.permute.xlu0 %594
    %597 = vst.msk [vmem:[#allocation3 + $0x5] sm:$0x1] %vm206, %v595
    %v598 = vpack.c.bf16 %v592, %v592
    %v599 = vld [vmem:[#allocation2 + $0x6] sm:$0x1]
    %601 = vrot.lane.b32.xlu0 %v598, 32
    %v602 = vpop.permute.xlu0 %601
    %v604 = vsel %vm125, %v602, 0
    %606 = vmatprep.subr.bf16.mxu0 0
    %607 = vmatpush1.bf16.msra.mxu0 %v121
    %608 = vmatprep.subr.bf16.mxu0 0
    %609 = vmatpush1.bf16.msra.mxu0 %v122
    %610 = vmatprep.subr.bf16.mxu0 0
    %611 = vmatpush1.bf16.msra.mxu0 0
    %612 = vmatprep.subr.bf16.mxu0 0
    %613 = vmatpush1.bf16.msra.mxu0 0
    %614 = vmatprep.subr.bf16.mxu0 0
    %615 = vmatpush1.bf16.msra.mxu0 0
    %616 = vmatprep.subr.bf16.mxu0 0
    %617 = vmatpush1.bf16.msra.mxu0 0
    %618 = vmatprep.subr.bf16.mxu0 0
    %619 = vmatpush1.bf16.msra.mxu0 0
    %620 = vmatprep.subr.bf16.mxu0 0
    %621 = vmatpush1.bf16.msra.mxu0 0
    %622 = vmatprep.subr.bf16.mxu0 0
    %623 = vmatpush1.bf16.msra.mxu0 0
    %624 = vmatprep.subr.bf16.mxu0 0
    %625 = vmatpush1.bf16.msra.mxu0 0
    %626 = vmatprep.subr.bf16.mxu0 0
    %627 = vmatpush1.bf16.msra.mxu0 0
    %628 = vmatprep.subr.bf16.mxu0 0
    %629 = vmatpush1.bf16.msra.mxu0 0
    %630 = vmatprep.subr.bf16.mxu0 0
    %631 = vmatpush1.bf16.msra.mxu0 0
    %632 = vmatprep.subr.bf16.mxu0 0
    %633 = vmatpush1.bf16.msra.mxu0 0
    %634 = vmatprep.subr.bf16.mxu0 0
    %635 = vmatpush1.bf16.msra.mxu0 0
    %636 = vmatprep.subr.bf16.mxu0 0
    %637 = vmatpush1.bf16.msra.mxu0 0
    %638 = vmatprep.mubr.bf16.mxu0 0
    %639 = vmatmul.mubr.bf16.gmra.mrb[0].mxu0 %v604
    %v640 = vpop.f32.mrb[0].mxu0
    %v641 = vadd.f32 %v599, %v640
    %v642 = vpop.f32.mrb[0].mxu0
    %v643 = vpop.f32.mrb[0].mxu0
    %v644 = vpop.f32.mrb[0].mxu0
    %645 = vdwg.mxu0
    %v646 = vtanh.pop %v641
    %v647 = vxor.u32 %v641, 2147483648
    %v648 = vmul.f32 %v647, 1.442695
    %v649 = vpow.pop %v648
    %v650 = vadd.f32 %v649, 1.0
    %v651 = vrcp.pop %v650
    %v652 = vmul.f32 1.0, %v651
    %v653 = vsel %vm108, %v646, %v652
    %v654 = vmul.f32 %v653, %v586
    %656 = vrot.lane.b32.xlu0 %v653, 64
    %v657 = vpop.permute.xlu0 %656
    %v659 = vmul.f32 %v653, %v657
    %661 = vrot.lane.b32.xlu0 %v659, 32
    %v662 = vpop.permute.xlu0 %661
    %v664 = vadd.f32 %v654, %v662
    %v665 = vtanh.pop %v664
    %667 = vrot.lane.b32.xlu0 %v665, 64
    %v668 = vpop.permute.xlu0 %667
    %v670 = vmul.f32 %v653, %v668
    %672 = vrot.lane.b32.xlu0 %v670, 32
    %v673 = vpop.permute.xlu0 %672
    %675 = vst.msk [vmem:[#allocation3 + $0x6] sm:$0x1] %vm206, %v673
    %v676 = vpack.c.bf16 %v670, %v670
    %v677 = vld [vmem:[#allocation2 + $0x7] sm:$0x1]
    %679 = vrot.lane.b32.xlu0 %v676, 32
    %v680 = vpop.permute.xlu0 %679
    %v682 = vsel %vm125, %v680, 0
    %684 = vmatprep.subr.bf16.mxu0 0
    %685 = vmatpush1.bf16.msra.mxu0 %v121
    %686 = vmatprep.subr.bf16.mxu0 0
    %687 = vmatpush1.bf16.msra.mxu0 %v122
    %688 = vmatprep.subr.bf16.mxu0 0
    %689 = vmatpush1.bf16.msra.mxu0 0
    %690 = vmatprep.subr.bf16.mxu0 0
    %691 = vmatpush1.bf16.msra.mxu0 0
    %692 = vmatprep.subr.bf16.mxu0 0
    %693 = vmatpush1.bf16.msra.mxu0 0
    %694 = vmatprep.subr.bf16.mxu0 0
    %695 = vmatpush1.bf16.msra.mxu0 0
    %696 = vmatprep.subr.bf16.mxu0 0
    %697 = vmatpush1.bf16.msra.mxu0 0
    %698 = vmatprep.subr.bf16.mxu0 0
    %699 = vmatpush1.bf16.msra.mxu0 0
    %700 = vmatprep.subr.bf16.mxu0 0
    %701 = vmatpush1.bf16.msra.mxu0 0
    %702 = vmatprep.subr.bf16.mxu0 0
    %703 = vmatpush1.bf16.msra.mxu0 0
    %704 = vmatprep.subr.bf16.mxu0 0
    %705 = vmatpush1.bf16.msra.mxu0 0
    %706 = vmatprep.subr.bf16.mxu0 0
    %707 = vmatpush1.bf16.msra.mxu0 0
    %708 = vmatprep.subr.bf16.mxu0 0
    %709 = vmatpush1.bf16.msra.mxu0 0
    %710 = vmatprep.subr.bf16.mxu0 0
    %711 = vmatpush1.bf16.msra.mxu0 0
    %712 = vmatprep.subr.bf16.mxu0 0
    %713 = vmatpush1.bf16.msra.mxu0 0
    %714 = vmatprep.subr.bf16.mxu0 0
    %715 = vmatpush1.bf16.msra.mxu0 0
    %716 = vmatprep.mubr.bf16.mxu0 0
    %717 = vmatmul.mubr.bf16.gmra.mrb[0].mxu0 %v682
    %v718 = vpop.f32.mrb[0].mxu0
    %v719 = vadd.f32 %v677, %v718
    %v720 = vpop.f32.mrb[0].mxu0
    %v721 = vpop.f32.mrb[0].mxu0
    %v722 = vpop.f32.mrb[0].mxu0
    %723 = vdwg.mxu0
    %v724 = vtanh.pop %v719
    %v725 = vxor.u32 %v719, 2147483648
    %v726 = vmul.f32 %v725, 1.442695
    %v727 = vpow.pop %v726
    %v728 = vadd.f32 %v727, 1.0
    %v729 = vrcp.pop %v728
    %v730 = vmul.f32 1.0, %v729
    %v731 = vsel %vm108, %v724, %v730
    %v732 = vmul.f32 %v731, %v664
    %734 = vrot.lane.b32.xlu0 %v731, 64
    %v735 = vpop.permute.xlu0 %734
    %v737 = vmul.f32 %v731, %v735
    %739 = vrot.lane.b32.xlu0 %v737, 32
    %v740 = vpop.permute.xlu0 %739
    %v742 = vadd.f32 %v732, %v740
    %v743 = vtanh.pop %v742
    %745 = vrot.lane.b32.xlu0 %v743, 64
    %v746 = vpop.permute.xlu0 %745
    %v748 = vmul.f32 %v731, %v746
    %750 = vrot.lane.b32.xlu0 %v748, 32
    %v751 = vpop.permute.xlu0 %750
    %753 = vst.msk [vmem:[#allocation3 + $0x7] sm:$0x1] %vm206, %v751
    %754 = vst.msk [vmem:[#allocation6] sm:$0x1] %vm206, %v751
    %756 = vrot.lane.b32.xlu0 %v742, 96
    %v757 = vpop.permute.xlu0 %756
    %759 = vst.msk [vmem:[#allocation8] sm:$0x1] %vm206, %v757
    %v760 = vld [vmem:[#allocation3] sm:$0xff]
    %v761 = vpack.c.bf16 %v760, %v760
    %v762 = vld [vmem:[%s5] sm:$0x1]
    %v764 = vlaneseq
    %v765 = vshrl.u32 %v764, 7
    %v766 = vsub.s32 0, %v765
    %v767 = vrot.slane %v762, %v766
    %v773 = vunpack.c.l.b16 %v100
    %v774 = vunpack.c.l.b16 %v101
    %v775 = vunpack.c.l.b16 %v102
    %v776 = vunpack.c.l.b16 %v103
    %v777 = vpack.c.b16 %v774, %v773
    %v778 = vpack.c.b16 %v776, %v775
    %v782 = vsel %vm125, %v761, 0
    %784 = vmatprep.subr.bf16.mxu0 0
    %785 = vmatpush1.bf16.msra.mxu0 %v777
    %786 = vmatprep.subr.bf16.mxu0 0
    %787 = vmatpush1.bf16.msra.mxu0 %v778
    %788 = vmatprep.subr.bf16.mxu0 0
    %789 = vmatpush1.bf16.msra.mxu0 0
    %790 = vmatprep.subr.bf16.mxu0 0
    %791 = vmatpush1.bf16.msra.mxu0 0
    %792 = vmatprep.subr.bf16.mxu0 0
    %793 = vmatpush1.bf16.msra.mxu0 0
    %794 = vmatprep.subr.bf16.mxu0 0
    %795 = vmatpush1.bf16.msra.mxu0 0
    %796 = vmatprep.subr.bf16.mxu0 0
    %797 = vmatpush1.bf16.msra.mxu0 0
    %798 = vmatprep.subr.bf16.mxu0 0
    %799 = vmatpush1.bf16.msra.mxu0 0
    %800 = vmatprep.subr.bf16.mxu0 0
    %801 = vmatpush1.bf16.msra.mxu0 0
    %802 = vmatprep.subr.bf16.mxu0 0
    %803 = vmatpush1.bf16.msra.mxu0 0
    %804 = vmatprep.subr.bf16.mxu0 0
    %805 = vmatpush1.bf16.msra.mxu0 0
    %806 = vmatprep.subr.bf16.mxu0 0
    %807 = vmatpush1.bf16.msra.mxu0 0
    %808 = vmatprep.subr.bf16.mxu0 0
    %809 = vmatpush1.bf16.msra.mxu0 0
    %810 = vmatprep.subr.bf16.mxu0 0
    %811 = vmatpush1.bf16.msra.mxu0 0
    %812 = vmatprep.subr.bf16.mxu0 0
    %813 = vmatpush1.bf16.msra.mxu0 0
    %814 = vmatprep.subr.bf16.mxu0 0
    %815 = vmatpush1.bf16.msra.mxu0 0
    %816 = vmatprep.mubr.bf16.mxu0 0
    %817 = vmatmul.mubr.bf16.gmra.mrb[0].mxu0 %v782
    %v818 = vpop.f32.mrb[0].mxu0
    %v819 = vadd.f32 %v767, %v818
    %v820 = vpop.f32.mrb[0].mxu0
    %v821 = vpop.f32.mrb[0].mxu0
    %v822 = vpop.f32.mrb[0].mxu0
    %823 = vdwg.mxu0
    %824 = vst.msk [vmem:[#allocation4] sm:$0xff] %vm51, %v819
    // Predicated region
    $region34: #{tpu_custom_call.1} parent=1 // pred_check
      _
    $region35: #{tpu_custom_call.1} parent=1 // pred_check_branch
      %826 = sbr.rel (0) target = $region37
    $region36: #{tpu_custom_call.1} parent=1 // pred_region
      %s828 = ssub.s32 128, 128
      %829 = vsyncadd [#allocation5], %s828
      %s831 = sshll.u32 [#allocation4], 4
      %s832 = int_to_ptr.vmem [resolvable:$true] %s831
      %834 = dma.vmem_to_hbm [thread:$0]  %s832, 128, %s8, [#allocation5]
    $region37: #{tpu_custom_call.1} parent=1 // pred_fallthru
      _
    // Predicated region
    $region38: #{tpu_custom_call.1} parent=1 // pred_check
      _
    $region39: #{tpu_custom_call.1} parent=1 // pred_check_branch
      %836 = sbr.rel (0) target = $region41
    $region40: #{tpu_custom_call.1} parent=1 // pred_region
      %s838 = ssub.s32 16, 16
      %839 = vsyncadd [#allocation7], %s838
      %s841 = sshll.u32 [#allocation6], 4
      %s842 = int_to_ptr.vmem [resolvable:$true] %s841
      %844 = dma.vmem_to_hbm [thread:$0]  %s842, 16, %s9, [#allocation7]
    $region41: #{tpu_custom_call.1} parent=1 // pred_fallthru
      _
    // Predicated region
    $region42: #{tpu_custom_call.1} parent=1 // pred_check
      _
    $region43: #{tpu_custom_call.1} parent=1 // pred_check_branch
      %846 = sbr.rel (0) target = $region45
    $region44: #{tpu_custom_call.1} parent=1 // pred_region
      %s848 = ssub.s32 16, 16
      %849 = vsyncadd [#allocation7], %s848
      %s851 = sshll.u32 [#allocation8], 4
      %s852 = int_to_ptr.vmem [resolvable:$true] %s851
      %854 = dma.vmem_to_hbm [thread:$0]  %s852, 16, %s10, [#allocation7]
    $region45: #{tpu_custom_call.1} parent=1 // pred_fallthru
      _
    // Predicated region
    $region46: #{tpu_custom_call.1} parent=1 // pred_check
      _
    $region47: #{tpu_custom_call.1} parent=1 // pred_check_branch
      %856 = sbr.rel (0) target = $region49
    $region48: #{tpu_custom_call.1} parent=1 // pred_region
      %857 = dma.done [#allocation5], 128
    $region49: #{tpu_custom_call.1} parent=1 // pred_fallthru
      _
    // Predicated region
    $region50: #{tpu_custom_call.1} parent=1 // pred_check
      _
    $region51: #{tpu_custom_call.1} parent=1 // pred_check_branch
      %859 = sbr.rel (0) target = $region53
    $region52: #{tpu_custom_call.1} parent=1 // pred_region
      %860 = dma.done [#allocation7], 16
    $region53: #{tpu_custom_call.1} parent=1 // pred_fallthru
      _
    // Predicated region
    $region54: #{tpu_custom_call.1} parent=1 // pred_check
      _
    $region55: #{tpu_custom_call.1} parent=1 // pred_check_branch
      %862 = sbr.rel (0) target = $region57
    $region56: #{tpu_custom_call.1} parent=1 // pred_region
      %863 = dma.done [#allocation7], 16
    $region57: #{tpu_custom_call.1} parent=1 // pred_fallthru
      _
    %864 = vsyncpa [#allocation5], 1
    %865 = vsyncpa [#allocation7], 1

</llo_original>
